<compile_context>
chip_gen: v7x
topology: tpu7x:2x2x1
jax: 0.10.0
libtpu: 0.0.40
codegen_flags: <defaults>
</compile_context>

<pallas_src>
import jax
import jax.numpy as jnp
from jax.experimental import pallas as pl
from jax.experimental.pallas import tpu as pltpu

_LANES = 128


def _copy_kernel(x_ref, o_ref):
    # Identity copy of the current (block_rows, 128) tile.
    o_ref[...] = x_ref[...]


def _pallas_reshape_copy(x, shape):
    """Materialized reshape: identity-copy the row-major stream via Pallas."""
    total = x.size
    dtype_size = jnp.dtype(x.dtype).itemsize

    # Unaligned (or empty) totals: padding would add ~4 extra full-array HBM
    # passes (concatenate + trailing slice), so just use the free metadata
    # reshape instead of the copy kernel.
    if total == 0 or total % _LANES != 0:
        return jnp.reshape(x, shape)

    rows = total // _LANES
    slab = x.reshape(rows, _LANES)

    # Generation-aware block sizing: 4 block buffers (in+out, double-buffered)
    # plus headroom must stay well under physical VMEM (64 MiB on v7x,
    # 128 MiB on v5e/v6e).
    try:
        vmem_capacity = pltpu.get_tpu_info().vmem_capacity_bytes
    except Exception:
        vmem_capacity = 64 * 1024 * 1024  # conservative default (v7x)
    block_cap_bytes = min(16 << 20, vmem_capacity // 8)
    cap_rows = max(32, (block_cap_bytes // (_LANES * dtype_size)) // 32 * 32)

    if rows <= 64:
        # Tiny array: a single full-extent block (always a legal block shape).
        br = rows
    else:
        # Keep the grid >= 2 steps (both v7x TensorCores share the stream),
        # block rows a multiple of 32 sublanes (native f32/bf16/int8 tiles),
        # capped by the generation-aware VMEM budget.
        half_rows = max(32, ((rows + 1) // 2) // 32 * 32)
        br = min(cap_rows, half_rows)

    grid = (pl.cdiv(rows, br),)
    block_bytes = br * _LANES * dtype_size
    vmem_limit = min(int(vmem_capacity), 4 * block_bytes + (4 << 20))

    out_slab = pl.pallas_call(
        _copy_kernel,
        out_shape=jax.ShapeDtypeStruct((rows, _LANES), slab.dtype),
        grid_spec=pltpu.PrefetchScalarGridSpec(
            num_scalar_prefetch=0,
            grid=grid,
            in_specs=[pl.BlockSpec((br, _LANES), lambda i: (i, 0))],
            out_specs=pl.BlockSpec((br, _LANES), lambda i: (i, 0)),
        ),
        compiler_params=pltpu.CompilerParams(
            dimension_semantics=("parallel",),
            vmem_limit_bytes=vmem_limit,
        ),
        # No input_output_aliases: x is not donated by the caller, and the
        # alias would force XLA to insert a defensive full-array copy.
        cost_estimate=pl.CostEstimate(
            flops=0,
            transcendentals=0,
            bytes_accessed=2 * total * dtype_size,
        ),
    )(slab)

    return out_slab.reshape(shape)


def reshape_layer(x, shape, *, force_pallas_copy=False):
    """Pallas implementation of ReshapeLayer.forward: x.reshape(shape).

    Default: contiguous reshape is pure metadata in XLA -> zero HBM traffic.
    Set force_pallas_copy=True to materialize the result with the Pallas
    identity-copy kernel (e.g. when a fresh buffer is genuinely required).
    """
    if not force_pallas_copy:
        return jnp.reshape(x, shape)
    return _pallas_reshape_copy(x, shape)


if __name__ == "__main__":
    key = jax.random.PRNGKey(0)

    # Primary case: NCHW input, batch=2, channels=4, spatial=16x16.
    x = jax.random.normal(key, (2, 4, 16, 16), dtype=jnp.float32)
    target_shape = (2, 4 * 16 * 16)
    ref = jnp.reshape(x, target_shape)

    # Default path: pure metadata reshape (no kernel, no copy).
    y_fast = jax.block_until_ready(reshape_layer(x, target_shape))
    assert y_fast.shape == ref.shape and y_fast.dtype == ref.dtype
    assert bool(jnp.array_equal(y_fast, ref)), "mismatch (metadata path)"

    # Pallas copy path (exercises pallas_call on the lane-dense slab).
    y = jax.block_until_ready(reshape_layer(x, target_shape, force_pallas_copy=True))
    assert y.shape == ref.shape and y.dtype == ref.dtype
    assert bool(jnp.array_equal(y, ref)), "mismatch vs reference reshape (Pallas copy)"

    # Rows not divisible by the chosen block rows (masked partial final block).
    x3 = jax.random.normal(jax.random.PRNGKey(2), (2, 40, 128), dtype=jnp.float32)  # rows=80
    y3 = jax.block_until_ready(reshape_layer(x3, (80, 128), force_pallas_copy=True))
    assert bool(jnp.array_equal(y3, jnp.reshape(x3, (80, 128)))), "mismatch (partial block)"

    # Non-128-aligned total: falls back to metadata reshape (no padding passes).
    x2 = jax.random.normal(jax.random.PRNGKey(1), (3, 5, 7), dtype=jnp.float32)
    y2 = jax.block_until_ready(reshape_layer(x2, (5, 21), force_pallas_copy=True))
    assert bool(jnp.array_equal(y2, jnp.reshape(x2, (5, 21)))), "mismatch (unaligned fallback)"

    print("KERNEL_OK")
</pallas_src>

<mosaic_0001>
module attributes {stable_mosaic.version = 11 : i64} {
  func.func @_copy_kernel(%arg0: i32, %arg1: memref<16x128xf32, #tpu.memory_space<vmem>>, %arg2: memref<16x128xf32, #tpu.memory_space<vmem>>) attributes {dimension_semantics = [#tpu.dimension_semantics<parallel>], iteration_bounds = array<i64: 1>, scalar_prefetch = 0 : i64, scratch_operands = 0 : i64, tpu.core_type = #tpu.core_type<tc>, window_params = [{transform_indices = @transform_0, window_bounds = array<i64: 16, 128>}, {transform_indices = @transform_1, window_bounds = array<i64: 16, 128>}]} {
    %c0 = arith.constant 0 : index
    %c0_0 = arith.constant 0 : index
    %0 = vector.load %arg1[%c0, %c0_0] : memref<16x128xf32, #tpu.memory_space<vmem>>, vector<16x128xf32>
    %c0_1 = arith.constant 0 : index
    %c0_2 = arith.constant 0 : index
    %1 = vector.load %arg2[%c0_1, %c0_2] : memref<16x128xf32, #tpu.memory_space<vmem>>, vector<16x128xf32>
    tpu.vector_store %arg2[%c0_1, %c0_2], %0 {strides = array<i32>} : memref<16x128xf32, #tpu.memory_space<vmem>>, vector<16x128xf32>,
    return
  }
  func.func @transform_0(%arg0: i32) -> (i32, i32) {
    %c0_i32 = arith.constant 0 : i32
    %c0_i32_0 = arith.constant 0 : i32
    return %arg0, %c0_i32 : i32, i32
  }
  func.func @transform_1(%arg0: i32) -> (i32, i32) {
    %c0_i32 = arith.constant 0 : i32
    %c0_i32_0 = arith.constant 0 : i32
    return %arg0, %c0_i32 : i32, i32
  }
}

</mosaic_0001>

<llo_original>
// kernel: tpu_custom_call.1
$region0: #{tpu_custom_call.1}
  #allocation0 [shape = 'u32[]', space=smem, size = 0x4, offset = 0x4, fixed_abs, tag = 'smem constant byte address 0x4 - core index']
  #allocation1 [shape = 'u32[144,128]{1,0:T(1,128)}', space=vmem, size = 0x12000, scoped, tag = 'internal scratch']
  %s0 = inlined_call_operand.hbm [shape: f32[16,128], index: 0, kind: input, shape index: {}]
  %s1 = inlined_call_operand.hbm [shape: f32[16,128], index: 1, kind: output, shape index: {}]
  %s2 = sld [smem:[#allocation0]]
  $region18: #{tpu_custom_call.1} parent=0
    _
  %s4 = ssub.s32 1, %s2
  %s5 = scalar_select 0, %s4, %s2
  $region1: #{tpu_custom_call.1} parent=0
    #allocation2 [shape = 'u8[8192]{0}', space=vmem, size = 0x2000, scoped, tag = 'input window, operand 0, single buffered']
    #allocation3 [shape = 's32[1]{0}', space=sflag, size = 0x4, scoped, tag = 'scoped memory for tpu_custom_call.1']
    #allocation4 [shape = 's32[1]{0}', space=sflag, size = 0x4, scoped, tag = 'scoped memory for tpu_custom_call.1']
    #allocation5 [shape = 'u8[8192]{0}', space=vmem, size = 0x2000, scoped, tag = 'output window, operand 0, single buffered']
    %6 = vsyncpa [#allocation3], 0
    %7 = vsyncpa [#allocation4], 0
    // Predicated region
    $region2: #{tpu_custom_call.1} parent=1 // pred_check
      _
    $region3: #{tpu_custom_call.1} parent=1 // pred_check_branch
      %9 = sbr.rel (0) target = $region5
    $region4: #{tpu_custom_call.1} parent=1 // pred_region
      %s11 = ssub.s32 256, 256
      %12 = vsyncadd [#allocation3], %s11
      %s13 = sshll.u32 [#allocation2], 4
      %s14 = int_to_ptr.vmem [resolvable:$true] %s13
      %19 = dma.hbm_to_vmem [thread:$0]  %s0, 256, %s14, [#allocation3], 128, 128, 8
    $region5: #{tpu_custom_call.1} parent=1 // pred_fallthru
      _
    // Predicated region
    $region6: #{tpu_custom_call.1} parent=1 // pred_check
      _
    $region7: #{tpu_custom_call.1} parent=1 // pred_check_branch
      %21 = sbr.rel (0) target = $region9
    $region8: #{tpu_custom_call.1} parent=1 // pred_region
      %22 = dma.done [#allocation3], 256
    $region9: #{tpu_custom_call.1} parent=1 // pred_fallthru
      _
    %v23 = vld [vmem:[#allocation2] sm:$0xff]
    %v24 = vld [vmem:[#allocation2 + $0x8] sm:$0xff]
    %25 = vst [vmem:[#allocation5] sm:$0xff] %v23
    %26 = vst [vmem:[#allocation5 + $0x8] sm:$0xff] %v24
    // Predicated region
    $region10: #{tpu_custom_call.1} parent=1 // pred_check
      _
    $region11: #{tpu_custom_call.1} parent=1 // pred_check_branch
      %28 = sbr.rel (0) target = $region13
    $region12: #{tpu_custom_call.1} parent=1 // pred_region
      %s30 = ssub.s32 256, 256
      %31 = vsyncadd [#allocation4], %s30
      %s32 = sshll.u32 [#allocation5], 4
      %s33 = int_to_ptr.vmem [resolvable:$true] %s32
      %38 = dma.vmem_to_hbm [thread:$0]  %s33, 256, %s1, [#allocation4], 128, 128, 8
    $region13: #{tpu_custom_call.1} parent=1 // pred_fallthru
      _
    // Predicated region
    $region14: #{tpu_custom_call.1} parent=1 // pred_check
      _
    $region15: #{tpu_custom_call.1} parent=1 // pred_check_branch
      %40 = sbr.rel (0) target = $region17
    $region16: #{tpu_custom_call.1} parent=1 // pred_region
      %41 = dma.done [#allocation4], 256
    $region17: #{tpu_custom_call.1} parent=1 // pred_fallthru
      _
    %42 = vsyncpa [#allocation3], 1
    %43 = vsyncpa [#allocation4], 1

</llo_original>
